<compile_context>
chip_gen: v7x
topology: tpu7x:2x2x1
jax: 0.10.0
libtpu: 0.0.40
codegen_flags: <defaults>
</compile_context>

<pallas_src>
import jax
import jax.numpy as jnp
from jax.experimental import pallas as pl
from jax.experimental.pallas import tpu as pltpu


def _conv2x2_s2_kernel(w_ref, p_ref, o_ref):
    # w_ref: SMEM (Cout, 4) f32   weights, tap index j = kh*2 + kw (Cin == 1)
    # p_ref: VMEM (4, tm)   f32   space-to-depth taps, lane-dense columns
    # o_ref: VMEM (Cout, tm) f32  output chunk, lane-dense columns
    p = p_ref[...]                                    # (4, tm)
    t0, t1, t2, t3 = p[0:1], p[1:2], p[2:3], p[3:4]   # each (1, tm)
    cout = o_ref.shape[0]
    for c in range(cout):                             # static, Cout == 4
        o_ref[c:c + 1, :] = (w_ref[c, 0] * t0 + w_ref[c, 1] * t1
                             + w_ref[c, 2] * t2 + w_ref[c, 3] * t3)


def _pick_tile(m, tile_budget_bytes=2 << 20):
    """Largest lane-dense chunk of the flattened spatial axis.

    Per grid step the kernel holds a (4, tm) input tile and a (4, tm) output
    tile, both double-buffered (~64*tm bytes).  A ~2 MiB input tile keeps the
    per-step working set ~8 MiB (fits every chip's scoped-VMEM default) while
    making each DMA large enough to amortize the per-step pipeline overhead.
    """
    max_tm = max(128, tile_budget_bytes // 16)        # 16 B / column / tile
    if m <= max_tm:
        return m                                      # whole axis, one block
    tm = (max_tm // 128) * 128
    while tm >= 128 and m % tm:
        tm -= 128                                     # dividing multiple of 128
    if tm < 128:
        tm = (max_tm // 128) * 128                    # masked tail tile
    return tm


def fre_transfer_forward(x_nchw, w_oihw):
    """Conv2d(1->Cout, k=2, s=2, no pad, no bias) on NCHW input via Pallas."""
    B, Cin, H, W = x_nchw.shape
    assert Cin == 1, "FreTransfer_1 has a single input channel"
    Cout = w_oihw.shape[0]
    OH, OW = H // 2, W // 2            # PyTorch floors odd spatial sizes
    M = OH * OW

    # Space-to-depth — the single wrapper-side data-movement op (free
    # reshapes + one XLA transpose):
    #   patches[b, kh*2+kw, oh*OW+ow] = x[b, 0, 2*oh+kh, 2*ow+kw]
    xs = x_nchw[:, 0, :2 * OH, :2 * OW]
    patches = (xs.reshape(B, OH, 2, OW, 2)
                 .transpose(0, 2, 4, 1, 3)
                 .reshape(B, 4, M)
                 .astype(jnp.float32))
    # Weight (Cout, 1, 2, 2) -> (Cout, 4), same tap ordering; goes to SMEM.
    w_mat = w_oihw.reshape(Cout, 4).astype(jnp.float32)

    tm = _pick_tile(M)
    grid = (B, pl.cdiv(M, tm))

    flops = 7 * Cout * B * M                          # 4 mul + 3 add / output
    bytes_accessed = 2 * 4 * (B * 4 * M) + 4 * Cout * 4

    out_flat = pl.pallas_call(
        _conv2x2_s2_kernel,
        out_shape=jax.ShapeDtypeStruct((B, Cout, M), jnp.float32),
        grid_spec=pltpu.PrefetchScalarGridSpec(
            num_scalar_prefetch=1,                    # (Cout, 4) weights -> SMEM
            grid=grid,
            in_specs=[
                pl.BlockSpec((None, 4, tm), lambda b, i, w: (b, 0, i)),
            ],
            out_specs=pl.BlockSpec((None, Cout, tm), lambda b, i, w: (b, 0, i)),
        ),
        compiler_params=pltpu.CompilerParams(
            dimension_semantics=("parallel", "parallel"),
            vmem_limit_bytes=32 << 20,
        ),
        cost_estimate=pl.CostEstimate(
            flops=flops, transcendentals=0, bytes_accessed=bytes_accessed),
    )(w_mat, patches)

    # (B, Cout, OH*OW) -> NCHW, a free metadata reshape (no transpose).
    return out_flat.reshape(B, Cout, OH, OW)


def init_fretransfer_params(key):
    """Deterministic synthetic params matching FreTransfer_1 (Conv2d(1,4,2,2))."""
    cout, cin, kh, kw = 4, 1, 2, 2
    fan_in = cin * kh * kw
    bound = 1.0 / jnp.sqrt(float(fan_in))
    w = jax.random.uniform(key, (cout, cin, kh, kw), jnp.float32, -bound, bound)
    return w


def fre_transfer_reference(x_nchw, w_oihw):
    """Pure-JAX reference (lax conv) for correctness checking."""
    return jax.lax.conv_general_dilated(
        x_nchw,
        w_oihw,
        window_strides=(2, 2),
        padding="VALID",
        dimension_numbers=("NCHW", "OIHW", "NCHW"),
    )


if __name__ == "__main__":
    key = jax.random.PRNGKey(0)
    k_in, k_par = jax.random.split(key)

    # Small shapes consistent with the module: NCHW, single input channel.
    B, C_IN, H, W = 2, 1, 16, 16
    x = jax.random.normal(k_in, (B, C_IN, H, W), jnp.float32)
    w = init_fretransfer_params(k_par)

    out = fre_transfer_forward(x, w)
    out = jax.block_until_ready(out)

    ref = jax.block_until_ready(fre_transfer_reference(x, w))
    assert out.shape == (B, 4, H // 2, W // 2), out.shape
    assert jnp.allclose(out, ref, rtol=1e-5, atol=1e-5), (
        float(jnp.max(jnp.abs(out - ref)))
    )
    print("KERNEL_OK")
</pallas_src>

<mosaic_0001>
module attributes {stable_mosaic.version = 11 : i64} {
  func.func @_conv2x2_s2_kernel(%arg0: i32, %arg1: i32, %arg2: memref<4x4xf32, #tpu.memory_space<smem>>, %arg3: memref<1x4x64xf32, #tpu.memory_space<vmem>>, %arg4: memref<1x4x64xf32, #tpu.memory_space<vmem>>) attributes {dimension_semantics = [#tpu.dimension_semantics<parallel>, #tpu.dimension_semantics<parallel>], iteration_bounds = array<i64: 2, 1>, scalar_prefetch = 1 : i64, scratch_operands = 0 : i64, tpu.core_type = #tpu.core_type<tc>, window_params = [{transform_indices = @transform_0, window_bounds = array<i64: 1, 4, 64>}, {transform_indices = @transform_1, window_bounds = array<i64: 1, 4, 64>}]} {
    %c0 = arith.constant 0 : index
    %c0_0 = arith.constant 0 : index
    %c0_1 = arith.constant 0 : index
    %0 = vector.load %arg3[%c0, %c0_0, %c0_1] : memref<1x4x64xf32, #tpu.memory_space<vmem>>, vector<1x4x64xf32>
    %1 = vector.shape_cast %0 : vector<1x4x64xf32> to vector<4x64xf32>
    %2 = vector.extract_strided_slice %1 {offsets = [0, 0], sizes = [1, 64], strides = [1, 1]} : vector<4x64xf32> to vector<1x64xf32>
    %3 = vector.extract_strided_slice %1 {offsets = [1, 0], sizes = [1, 64], strides = [1, 1]} : vector<4x64xf32> to vector<1x64xf32>
    %4 = vector.extract_strided_slice %1 {offsets = [2, 0], sizes = [1, 64], strides = [1, 1]} : vector<4x64xf32> to vector<1x64xf32>
    %5 = vector.extract_strided_slice %1 {offsets = [3, 0], sizes = [1, 64], strides = [1, 1]} : vector<4x64xf32> to vector<1x64xf32>
    %c0_2 = arith.constant 0 : index
    %c0_3 = arith.constant 0 : index
    %6 = memref.load %arg2[%c0_2, %c0_3] : memref<4x4xf32, #tpu.memory_space<smem>>
    %7 = vector.broadcast %6 : f32 to vector<1x64xf32>
    %8 = arith.mulf %7, %2 : vector<1x64xf32>
    %c0_4 = arith.constant 0 : index
    %c1 = arith.constant 1 : index
    %9 = memref.load %arg2[%c0_4, %c1] : memref<4x4xf32, #tpu.memory_space<smem>>
    %10 = vector.broadcast %9 : f32 to vector<1x64xf32>
    %11 = arith.mulf %10, %3 : vector<1x64xf32>
    %12 = arith.addf %8, %11 : vector<1x64xf32>
    %c0_5 = arith.constant 0 : index
    %c2 = arith.constant 2 : index
    %13 = memref.load %arg2[%c0_5, %c2] : memref<4x4xf32, #tpu.memory_space<smem>>
    %14 = vector.broadcast %13 : f32 to vector<1x64xf32>
    %15 = arith.mulf %14, %4 : vector<1x64xf32>
    %16 = arith.addf %12, %15 : vector<1x64xf32>
    %c0_6 = arith.constant 0 : index
    %c3 = arith.constant 3 : index
    %17 = memref.load %arg2[%c0_6, %c3] : memref<4x4xf32, #tpu.memory_space<smem>>
    %18 = vector.broadcast %17 : f32 to vector<1x64xf32>
    %19 = arith.mulf %18, %5 : vector<1x64xf32>
    %20 = arith.addf %16, %19 : vector<1x64xf32>
    %c0_7 = arith.constant 0 : index
    %c0_8 = arith.constant 0 : index
    %c0_9 = arith.constant 0 : index
    %21 = vector.load %arg4[%c0_7, %c0_8, %c0_9] : memref<1x4x64xf32, #tpu.memory_space<vmem>>, vector<1x1x64xf32>
    %22 = vector.shape_cast %21 : vector<1x1x64xf32> to vector<1x64xf32>
    %23 = vector.shape_cast %20 : vector<1x64xf32> to vector<1x1x64xf32>
    tpu.vector_store %arg4[%c0_7, %c0_8, %c0_9], %23 {strides = array<i32>} : memref<1x4x64xf32, #tpu.memory_space<vmem>>, vector<1x1x64xf32>,
    %c1_10 = arith.constant 1 : index
    %c0_11 = arith.constant 0 : index
    %24 = memref.load %arg2[%c1_10, %c0_11] : memref<4x4xf32, #tpu.memory_space<smem>>
    %25 = vector.broadcast %24 : f32 to vector<1x64xf32>
    %26 = arith.mulf %25, %2 : vector<1x64xf32>
    %c1_12 = arith.constant 1 : index
    %c1_13 = arith.constant 1 : index
    %27 = memref.load %arg2[%c1_12, %c1_13] : memref<4x4xf32, #tpu.memory_space<smem>>
    %28 = vector.broadcast %27 : f32 to vector<1x64xf32>
    %29 = arith.mulf %28, %3 : vector<1x64xf32>
    %30 = arith.addf %26, %29 : vector<1x64xf32>
    %c1_14 = arith.constant 1 : index
    %c2_15 = arith.constant 2 : index
    %31 = memref.load %arg2[%c1_14, %c2_15] : memref<4x4xf32, #tpu.memory_space<smem>>
    %32 = vector.broadcast %31 : f32 to vector<1x64xf32>
    %33 = arith.mulf %32, %4 : vector<1x64xf32>
    %34 = arith.addf %30, %33 : vector<1x64xf32>
    %c1_16 = arith.constant 1 : index
    %c3_17 = arith.constant 3 : index
    %35 = memref.load %arg2[%c1_16, %c3_17] : memref<4x4xf32, #tpu.memory_space<smem>>
    %36 = vector.broadcast %35 : f32 to vector<1x64xf32>
    %37 = arith.mulf %36, %5 : vector<1x64xf32>
    %38 = arith.addf %34, %37 : vector<1x64xf32>
    %c0_18 = arith.constant 0 : index
    %c1_19 = arith.constant 1 : index
    %c0_20 = arith.constant 0 : index
    %39 = vector.load %arg4[%c0_18, %c1_19, %c0_20] : memref<1x4x64xf32, #tpu.memory_space<vmem>>, vector<1x1x64xf32>
    %40 = vector.shape_cast %39 : vector<1x1x64xf32> to vector<1x64xf32>
    %41 = vector.shape_cast %38 : vector<1x64xf32> to vector<1x1x64xf32>
    tpu.vector_store %arg4[%c0_18, %c1_19, %c0_20], %41 {strides = array<i32>} : memref<1x4x64xf32, #tpu.memory_space<vmem>>, vector<1x1x64xf32>,
    %c2_21 = arith.constant 2 : index
    %c0_22 = arith.constant 0 : index
    %42 = memref.load %arg2[%c2_21, %c0_22] : memref<4x4xf32, #tpu.memory_space<smem>>
    %43 = vector.broadcast %42 : f32 to vector<1x64xf32>
    %44 = arith.mulf %43, %2 : vector<1x64xf32>
    %c2_23 = arith.constant 2 : index
    %c1_24 = arith.constant 1 : index
    %45 = memref.load %arg2[%c2_23, %c1_24] : memref<4x4xf32, #tpu.memory_space<smem>>
    %46 = vector.broadcast %45 : f32 to vector<1x64xf32>
    %47 = arith.mulf %46, %3 : vector<1x64xf32>
    %48 = arith.addf %44, %47 : vector<1x64xf32>
    %c2_25 = arith.constant 2 : index
    %c2_26 = arith.constant 2 : index
    %49 = memref.load %arg2[%c2_25, %c2_26] : memref<4x4xf32, #tpu.memory_space<smem>>
    %50 = vector.broadcast %49 : f32 to vector<1x64xf32>
    %51 = arith.mulf %50, %4 : vector<1x64xf32>
    %52 = arith.addf %48, %51 : vector<1x64xf32>
    %c2_27 = arith.constant 2 : index
    %c3_28 = arith.constant 3 : index
    %53 = memref.load %arg2[%c2_27, %c3_28] : memref<4x4xf32, #tpu.memory_space<smem>>
    %54 = vector.broadcast %53 : f32 to vector<1x64xf32>
    %55 = arith.mulf %54, %5 : vector<1x64xf32>
    %56 = arith.addf %52, %55 : vector<1x64xf32>
    %c0_29 = arith.constant 0 : index
    %c2_30 = arith.constant 2 : index
    %c0_31 = arith.constant 0 : index
    %57 = vector.load %arg4[%c0_29, %c2_30, %c0_31] : memref<1x4x64xf32, #tpu.memory_space<vmem>>, vector<1x1x64xf32>
    %58 = vector.shape_cast %57 : vector<1x1x64xf32> to vector<1x64xf32>
    %59 = vector.shape_cast %56 : vector<1x64xf32> to vector<1x1x64xf32>
    tpu.vector_store %arg4[%c0_29, %c2_30, %c0_31], %59 {strides = array<i32>} : memref<1x4x64xf32, #tpu.memory_space<vmem>>, vector<1x1x64xf32>,
    %c3_32 = arith.constant 3 : index
    %c0_33 = arith.constant 0 : index
    %60 = memref.load %arg2[%c3_32, %c0_33] : memref<4x4xf32, #tpu.memory_space<smem>>
    %61 = vector.broadcast %60 : f32 to vector<1x64xf32>
    %62 = arith.mulf %61, %2 : vector<1x64xf32>
    %c3_34 = arith.constant 3 : index
    %c1_35 = arith.constant 1 : index
    %63 = memref.load %arg2[%c3_34, %c1_35] : memref<4x4xf32, #tpu.memory_space<smem>>
    %64 = vector.broadcast %63 : f32 to vector<1x64xf32>
    %65 = arith.mulf %64, %3 : vector<1x64xf32>
    %66 = arith.addf %62, %65 : vector<1x64xf32>
    %c3_36 = arith.constant 3 : index
    %c2_37 = arith.constant 2 : index
    %67 = memref.load %arg2[%c3_36, %c2_37] : memref<4x4xf32, #tpu.memory_space<smem>>
    %68 = vector.broadcast %67 : f32 to vector<1x64xf32>
    %69 = arith.mulf %68, %4 : vector<1x64xf32>
    %70 = arith.addf %66, %69 : vector<1x64xf32>
    %c3_38 = arith.constant 3 : index
    %c3_39 = arith.constant 3 : index
    %71 = memref.load %arg2[%c3_38, %c3_39] : memref<4x4xf32, #tpu.memory_space<smem>>
    %72 = vector.broadcast %71 : f32 to vector<1x64xf32>
    %73 = arith.mulf %72, %5 : vector<1x64xf32>
    %74 = arith.addf %70, %73 : vector<1x64xf32>
    %c0_40 = arith.constant 0 : index
    %c3_41 = arith.constant 3 : index
    %c0_42 = arith.constant 0 : index
    %75 = vector.load %arg4[%c0_40, %c3_41, %c0_42] : memref<1x4x64xf32, #tpu.memory_space<vmem>>, vector<1x1x64xf32>
    %76 = vector.shape_cast %75 : vector<1x1x64xf32> to vector<1x64xf32>
    %77 = vector.shape_cast %74 : vector<1x64xf32> to vector<1x1x64xf32>
    tpu.vector_store %arg4[%c0_40, %c3_41, %c0_42], %77 {strides = array<i32>} : memref<1x4x64xf32, #tpu.memory_space<vmem>>, vector<1x1x64xf32>,
    return
  }
  func.func @transform_0(%arg0: i32, %arg1: i32, %arg2: memref<4x4xf32, #tpu.memory_space<smem>>) -> (i32, i32, i32) {
    %c0_i32 = arith.constant 0 : i32
    %c0_i32_0 = arith.constant 0 : i32
    return %arg0, %c0_i32, %arg1 : i32, i32, i32
  }
  func.func @transform_1(%arg0: i32, %arg1: i32, %arg2: memref<4x4xf32, #tpu.memory_space<smem>>) -> (i32, i32, i32) {
    %c0_i32 = arith.constant 0 : i32
    %c0_i32_0 = arith.constant 0 : i32
    return %arg0, %c0_i32, %arg1 : i32, i32, i32
  }
}

</mosaic_0001>

<llo_original>
// kernel: tpu_custom_call.1
$region0: #{tpu_custom_call.1}
  #allocation0 [shape = 'u32[]', space=smem, size = 0x4, offset = 0x4, fixed_abs, tag = 'smem constant byte address 0x4 - core index']
  #allocation1 [shape = 'u32[144,128]{1,0:T(1,128)}', space=vmem, size = 0x12000, scoped, tag = 'internal scratch']
  #allocation2 [shape = 's32[1]{0}', space=sflag, size = 0x4, scoped, tag = 'scoped memory for tpu_custom_call.1']
  #allocation3 [shape = 'u8[2048]{0}', space=smem, size = 0x800, scoped, tag = 'prefetched SMEM operand 0']
  %s0 = inlined_call_operand.hbm [shape: f32[4,4], index: 0, kind: input, shape index: {}]
  %s1 = inlined_call_operand.hbm [shape: f32[2,4,64], index: 1, kind: input, shape index: {}]
  %s2 = inlined_call_operand.hbm [shape: f32[2,4,64], index: 2, kind: output, shape index: {}]
  %s3 = sld [smem:[#allocation0]]
  $region41: #{tpu_custom_call.1} parent=0
    _
  %s5 = ssub.s32 1, %s3
  %s6 = scalar_select 0, %s5, %s3
  %8 = dma.hbm_to_smem %s0, 64, [#allocation3], [#allocation2]
  %9 = dma.done [#allocation2], 64
  %10 = sfence
  $region1: #{tpu_custom_call.1} parent=0
    #allocation4 [shape = 'u8[4096]{0}', space=vmem, size = 0x1000, scoped, tag = 'input window, operand 1']
    #allocation5 [shape = 's32[2]{0}', space=sflag, size = 0x8, scoped, tag = 'scoped memory for tpu_custom_call.1']
    #allocation6 [shape = 's32[2]{0}', space=sflag, size = 0x8, scoped, tag = 'scoped memory for tpu_custom_call.1']
    #allocation7 [shape = 'u8[4096]{0}', space=vmem, size = 0x1000, scoped, tag = 'output window, operand 0']
    %11 = vsyncpa [#allocation5], 0
    %s12 = scalar_lea.sflag [#allocation5], 1
    %13 = vsyncpa %s12, 0
    %14 = vsyncpa [#allocation6], 0
    %s15 = scalar_lea.sflag [#allocation6], 1
    %16 = vsyncpa %s15, 0
    loop: start=0, step=1, limit=4
    $region2: #{tpu_custom_call.1} parent=1 // loop_pre_header
      _
    $region3: #{tpu_custom_call.1} parent=1 // loop_header
      %s18 = sphi 0, %s22
      %p19 = scmp.ge.s32.totalorder %s18, 4
      %s25 = sphi 0, %s37
      %s26 = sphi 0, %s33
      %s27 = sphi 0, %s25
      %s28 = sphi 0, %s26
      %s29 = sphi 0, %s27
      %s30 = sphi 0, %s28
      %s42 = sphi 0, %s44
      %s45 = sphi 0, %s42
      %s46 = sphi 0, %s45
      %s62 = sphi 0, %s46
      %s70 = sphi 0, %s72
      %s73 = sphi 0, %s70
      %s74 = sphi 0, %s73
      %s90 = sphi 0, %s74
    $region4: #{tpu_custom_call.1} parent=1 // loop_header_branch
      %21 = sbr.rel (%p19) target = $region8
    $region5: #{tpu_custom_call.1} parent=1 // loop_body
      %s23 = ssub.s32 %s18, 1
      %s24 = ssub.s32 %s18, 2
      %s31 = sadd.s32 1, %s26
      %p32 = scmp.ge.s32.totalorder %s31, 1
      %s33 = scalar_select %p32, 0, %s31
      %s34 = sadd.s32 1, %s25
      %s35 = scalar_select %p32, %s34, %s25
      %p36 = scmp.ge.s32.totalorder %s35, 2
      %s37 = scalar_select %p36, 0, %s35
      %s38 = ssub.s32 %s25, %s37
      %s39 = ssub.s32 %s26, %s33
      %s40 = sor.u32 %s38, %s39
      %p41 = scmp.eq.s32.totalorder %s40, 0
      %s43 = sadd.s32 %s42, 1
      %s44 = scalar_select %p41, %s42, %s43
      %p47 = pneg %p41
      %p48 = scmp.eq.s32.totalorder %s18, 1
      %p49 = por %p47, %p48
      %p50 = scmp.ne.s32.totalorder %s42, %s45
      %p51 = scmp.eq.s32.totalorder %s18, 0
      %p52 = por %p50, %p51
      %p53 = scmp.ne.s32.totalorder %s42, %s45
      %p54 = scmp.eq.s32.totalorder %s23, 1
      %p55 = por %p53, %p54
      %p56 = scmp.ne.s32.totalorder %s45, %s46
      %p57 = scmp.eq.s32.totalorder %s23, 0
      %p58 = por %p56, %p57
      %p59 = scmp.ne.s32.totalorder %s45, %s46
      %p60 = scmp.eq.s32.totalorder %s24, 1
      %p61 = por %p59, %p60
      %p63 = scmp.ne.s32.totalorder %s46, %s62
      %p64 = scmp.eq.s32.totalorder %s24, 0
      %p65 = por %p63, %p64
      %s66 = ssub.s32 %s25, %s37
      %s67 = ssub.s32 %s26, %s33
      %s68 = sor.u32 %s66, %s67
      %p69 = scmp.eq.s32.totalorder %s68, 0
      %s71 = sadd.s32 %s70, 1
      %s72 = scalar_select %p69, %s70, %s71
      %p75 = pneg %p69
      %p76 = scmp.eq.s32.totalorder %s18, 1
      %p77 = por %p75, %p76
      %p78 = scmp.ne.s32.totalorder %s70, %s73
      %p79 = scmp.eq.s32.totalorder %s18, 0
      %p80 = por %p78, %p79
      %p81 = scmp.ne.s32.totalorder %s70, %s73
      %p82 = scmp.eq.s32.totalorder %s23, 1
      %p83 = por %p81, %p82
      %p84 = scmp.ne.s32.totalorder %s73, %s74
      %p85 = scmp.eq.s32.totalorder %s23, 0
      %p86 = por %p84, %p85
      %p87 = scmp.ne.s32.totalorder %s73, %s74
      %p88 = scmp.eq.s32.totalorder %s24, 1
      %p89 = por %p87, %p88
      %p91 = scmp.ne.s32.totalorder %s74, %s90
      %p92 = scmp.eq.s32.totalorder %s24, 0
      %p93 = por %p91, %p92
      %p94 = scmp.le.s32.totalorder 1, %s18
      %p95 = scmp.lt.s32.totalorder %s18, 3
      %p96 = pnand %p94, %p95
      %p97 = pneg %p96
      // Predicated region
      $region9: #{tpu_custom_call.1} parent=5 // pred_check
        _
      $region10: #{tpu_custom_call.1} parent=5 // pred_check_branch
        %99 = sbr.rel (%p96) target = $region12
      $region11: #{tpu_custom_call.1} parent=5 // pred_region
        %s100 = ssub.s32 %s18, 1
      $region12: #{tpu_custom_call.1} parent=5 // pred_fallthru
        _
      %p101 = scmp.lt.s32.totalorder %s18, 2
      // Predicated region
      $region13: #{tpu_custom_call.1} parent=5 // pred_check
        %p102 = pneg %p101
      $region14: #{tpu_custom_call.1} parent=5 // pred_check_branch
        %104 = sbr.rel (%p102) target = $region16
      $region15: #{tpu_custom_call.1} parent=5 // pred_region
        // Predicated region
        $region17: #{tpu_custom_call.1} parent=15 // pred_check
          %p105 = pneg %p52
        $region18: #{tpu_custom_call.1} parent=15 // pred_check_branch
          %107 = sbr.rel (%p105) target = $region20
        $region19: #{tpu_custom_call.1} parent=15 // pred_region
          %s108 = sand.u32 %s42, 1
          %s109 = scalar_lea.sflag [#allocation5], %s108
          %s110 = sand.u32 %s42, 1
          %s111 = smul.addr %s110, 4
          %s112 = scalar_lea.vmem [#allocation4], %s111
          %s114 = ssub.s32 64, 64
          %115 = vsyncadd %s109, %s114
          %s116 = sadd.s32 %s26, %s25
          %s117 = smul.addr %s116, 64
          %s118 = scalar_lea.hbm %s1, %s117
          %s120 = sshll.u32 %s112, 4
          %s121 = int_to_ptr.vmem [resolvable:$true] %s120
          %123 = dma.hbm_to_vmem [thread:$0]  %s118, 64, %s121, %s109
        $region20: #{tpu_custom_call.1} parent=15 // pred_fallthru
          _
      $region16: #{tpu_custom_call.1} parent=5 // pred_fallthru
        _
      %p124 = scmp.le.s32.totalorder 1, %s18
      %p125 = scmp.lt.s32.totalorder %s18, 3
      %p126 = pnand %p124, %p125
      %p127 = pneg %p126
      // Predicated region
      $region21: #{tpu_custom_call.1} parent=5 // pred_check
        _
      $region22: #{tpu_custom_call.1} parent=5 // pred_check_branch
        %129 = sbr.rel (%p126) target = $region24
      $region23: #{tpu_custom_call.1} parent=5 // pred_region
        %s130 = ssub.s32 %s18, 1
        %s131 = sand.u32 %s45, 1
        %s132 = scalar_lea.sflag [#allocation5], %s131
        %s133 = sand.u32 %s45, 1
        %s134 = smul.addr %s133, 4
        %s135 = scalar_lea.vmem [#allocation4], %s134
        // Predicated region
        $region25: #{tpu_custom_call.1} parent=23 // pred_check
          %p136 = pneg %p58
        $region26: #{tpu_custom_call.1} parent=23 // pred_check_branch
          %138 = sbr.rel (%p136) target = $region28
        $region27: #{tpu_custom_call.1} parent=23 // pred_region
          %139 = dma.done %s132, 64
        $region28: #{tpu_custom_call.1} parent=23 // pred_fallthru
          _
        %s140 = sand.u32 %s45, 1
        %s141 = scalar_lea.sflag [#allocation5], %s140
        %s142 = sand.u32 %s45, 1
        %s143 = smul.addr %s142, 4
        %s144 = scalar_lea.vmem [#allocation4], %s143
        %p145 = pneg %p58
        %p146 = pneg %p55
        %p147 = pneg %p86
        %p148 = pneg %p83
        %s149 = sand.u32 %s73, 1
        %s150 = scalar_lea.sflag [#allocation6], %s149
        %s151 = sand.u32 %s73, 1
        %s152 = smul.addr %s151, 4
        %s153 = scalar_lea.vmem [#allocation7], %s152
        %v154 = vld [vmem:[%s135] sm:$0xf]
        %s155 = sld [smem:[#allocation3]]
        %v156 = vstv %s155
        %v157 = vmul.f32 %v156, %v154
        %s158 = sld [smem:[#allocation3 + $0x1]]
        %v159 = vstv %s158
        %v160 = vmul.f32 %v159, %v154
        %v162 = vrot.slane %v160, 1
        %v164 = vadd.f32 %v157, %v162
        %s165 = sld [smem:[#allocation3 + $0x2]]
        %v166 = vstv %s165
        %v167 = vmul.f32 %v166, %v154
        %v169 = vrot.slane %v167, 2
        %v171 = vadd.f32 %v164, %v169
        %s172 = sld [smem:[#allocation3 + $0x3]]
        %v173 = vstv %s172
        %v174 = vmul.f32 %v173, %v154
        %v176 = vrot.slane %v174, 3
        %v178 = vadd.f32 %v171, %v176
        %vm179 = vcmask 516096
        %180 = vst.msk [vmem:[%s153] sm:$0x1] %vm179, %v178
        %s181 = sld [smem:[#allocation3 + $0x80]]
        %v182 = vstv %s181
        %v183 = vmul.f32 %v182, %v154
        %s184 = sld [smem:[#allocation3 + $0x81]]
        %v185 = vstv %s184
        %v186 = vmul.f32 %v185, %v154
        %v188 = vrot.slane %v186, 1
        %v190 = vadd.f32 %v183, %v188
        %s191 = sld [smem:[#allocation3 + $0x82]]
        %v192 = vstv %s191
        %v193 = vmul.f32 %v192, %v154
        %v195 = vrot.slane %v193, 2
        %v197 = vadd.f32 %v190, %v195
        %s198 = sld [smem:[#allocation3 + $0x83]]
        %v199 = vstv %s198
        %v200 = vmul.f32 %v199, %v154
        %v202 = vrot.slane %v200, 3
        %v204 = vadd.f32 %v197, %v202
        %205 = vst.msk [vmem:[%s153 + $0x1] sm:$0x1] %vm179, %v204
        %s206 = sld [smem:[#allocation3 + $0x100]]
        %v207 = vstv %s206
        %v208 = vmul.f32 %v207, %v154
        %s209 = sld [smem:[#allocation3 + $0x101]]
        %v210 = vstv %s209
        %v211 = vmul.f32 %v210, %v154
        %v213 = vrot.slane %v211, 1
        %v215 = vadd.f32 %v208, %v213
        %s216 = sld [smem:[#allocation3 + $0x102]]
        %v217 = vstv %s216
        %v218 = vmul.f32 %v217, %v154
        %v220 = vrot.slane %v218, 2
        %v222 = vadd.f32 %v215, %v220
        %s223 = sld [smem:[#allocation3 + $0x103]]
        %v224 = vstv %s223
        %v225 = vmul.f32 %v224, %v154
        %v227 = vrot.slane %v225, 3
        %v229 = vadd.f32 %v222, %v227
        %230 = vst.msk [vmem:[%s153 + $0x2] sm:$0x1] %vm179, %v229
        %s231 = sld [smem:[#allocation3 + $0x180]]
        %v232 = vstv %s231
        %v233 = vmul.f32 %v232, %v154
        %s234 = sld [smem:[#allocation3 + $0x181]]
        %v235 = vstv %s234
        %v236 = vmul.f32 %v235, %v154
        %v238 = vrot.slane %v236, 1
        %v240 = vadd.f32 %v233, %v238
        %s241 = sld [smem:[#allocation3 + $0x182]]
        %v242 = vstv %s241
        %v243 = vmul.f32 %v242, %v154
        %v245 = vrot.slane %v243, 2
        %v247 = vadd.f32 %v240, %v245
        %s248 = sld [smem:[#allocation3 + $0x183]]
        %v249 = vstv %s248
        %v250 = vmul.f32 %v249, %v154
        %v252 = vrot.slane %v250, 3
        %v254 = vadd.f32 %v247, %v252
        %255 = vst.msk [vmem:[%s153 + $0x3] sm:$0x1] %vm179, %v254
        %s256 = sand.u32 %s73, 1
        %s257 = scalar_lea.sflag [#allocation6], %s256
        %s258 = sand.u32 %s73, 1
        %s259 = smul.addr %s258, 4
        %s260 = scalar_lea.vmem [#allocation7], %s259
        // Predicated region
        $region29: #{tpu_custom_call.1} parent=23 // pred_check
          %p261 = pneg %p83
        $region30: #{tpu_custom_call.1} parent=23 // pred_check_branch
          %263 = sbr.rel (%p261) target = $region32
        $region31: #{tpu_custom_call.1} parent=23 // pred_region
          %s265 = ssub.s32 64, 64
          %266 = vsyncadd %s257, %s265
          %s267 = sadd.s32 %s28, %s27
          %s268 = smul.addr %s267, 64
          %s269 = scalar_lea.hbm %s2, %s268
          %s271 = sshll.u32 %s260, 4
          %s272 = int_to_ptr.vmem [resolvable:$true] %s271
          %274 = dma.vmem_to_hbm [thread:$0]  %s272, 64, %s269, %s257
        $region32: #{tpu_custom_call.1} parent=23 // pred_fallthru
          _
      $region24: #{tpu_custom_call.1} parent=5 // pred_fallthru
        _
      %p275 = scmp.le.s32.totalorder 2, %s18
      // Predicated region
      $region33: #{tpu_custom_call.1} parent=5 // pred_check
        %p276 = pneg %p275
      $region34: #{tpu_custom_call.1} parent=5 // pred_check_branch
        %278 = sbr.rel (%p276) target = $region36
      $region35: #{tpu_custom_call.1} parent=5 // pred_region
        %s279 = ssub.s32 %s18, 2
        // Predicated region
        $region37: #{tpu_custom_call.1} parent=35 // pred_check
          %p280 = pneg %p89
        $region38: #{tpu_custom_call.1} parent=35 // pred_check_branch
          %282 = sbr.rel (%p280) target = $region40
        $region39: #{tpu_custom_call.1} parent=35 // pred_region
          %s283 = sand.u32 %s74, 1
          %s284 = scalar_lea.sflag [#allocation6], %s283
          %s285 = sand.u32 %s74, 1
          %s286 = smul.addr %s285, 4
          %s287 = scalar_lea.vmem [#allocation7], %s286
          %288 = dma.done %s284, 64
        $region40: #{tpu_custom_call.1} parent=35 // pred_fallthru
          _
      $region36: #{tpu_custom_call.1} parent=5 // pred_fallthru
        _
    $region6: #{tpu_custom_call.1} parent=1 // loop_footer
      %s22 = sadd.s32 1, %s18
    $region7: #{tpu_custom_call.1} parent=1 // loop_footer_branch
      %17 = sbr.rel target = $region3
    $region8: #{tpu_custom_call.1} parent=1 // loop_exit
      _
    %289 = vsyncpa [#allocation5], 1
    %s290 = scalar_lea.sflag [#allocation5], 1
    %291 = vsyncpa %s290, 1
    %292 = vsyncpa [#allocation6], 1
    %s293 = scalar_lea.sflag [#allocation6], 1
    %294 = vsyncpa %s293, 1

</llo_original>
